<compile_context>
chip_gen: v5e
topology: v5e:2x2
jax: 0.10.0
libtpu: 0.0.40
codegen_flags: <defaults>
</compile_context>

<pallas_src>
import math
import functools

import jax
import jax.numpy as jnp
from jax.experimental import pallas as pl
from jax.experimental.pallas import tpu as pltpu


_MAX_BLOCK_BYTES = 2 * 1024 * 1024   # cap per output block (Pallas double-buffers it)
_FALLBACK_ELEMS = 64 * 1024          # below this, plain jnp beats kernel launch overhead


def _sinusoidal_kernel(time_ref, freqs_ref, out_ref, *, half_dim: int, aligned: bool):
    # time_ref: [TB, 1] f32, freqs_ref: [1, H] f32, out_ref: [TB, 2H] f32
    emb = time_ref[...] * freqs_ref[...]          # [TB, H] outer product (broadcast)
    if aligned:
        # half_dim is a multiple of 128: both halves are lane-aligned -> unmasked vst,
        # and no concat temp / XLU lane-shift to assemble the row.
        out_ref[:, :half_dim] = jnp.sin(emb)
        out_ref[:, half_dim:] = jnp.cos(emb)
    else:
        # Generic path: one full-width store of the concatenated halves.
        # TODO(synk): for dim < 128 with very large batch both the store and the trig
        # compute are lane-sparse; a fully lane-dense repacking needs either a
        # cos(x)=sin(x+pi/2) rewrite or 2x trig work, so small problems go through the
        # jnp fallback and dim >= 256 is the documented fast path instead.
        out_ref[...] = jnp.concatenate([jnp.sin(emb), jnp.cos(emb)], axis=-1)


def _pick_tile_b(b: int, dim: int) -> int:
    """Batch tile: byte-capped, multiple of 8 (or == b), >= 2 grid steps for b >= 64."""
    max_rows_by_bytes = max(8, _MAX_BLOCK_BYTES // (4 * dim))
    tile = min(b, 512, max_rows_by_bytes)
    if b >= 64:
        # Guarantee at least 2 grid steps so "parallel" actually shards across v7x's
        # two TensorCores and the output writeback pipelines behind compute.
        tile = min(tile, max(8, b // 2))
    if tile >= b:
        return b                       # whole-array block along batch is always legal
    return max(8, (tile // 8) * 8)     # (8,128) sublane rule for partial blocks


def sinusoidal_position_embeddings(time: jax.Array, dim: int, *,
                                   force_pallas: bool = False) -> jax.Array:
    """time: [B] float array of timesteps. Returns [B, dim] float32."""
    assert dim % 2 == 0, "dim must be even (PyTorch module emits 2*(dim//2) columns)"
    half_dim = dim // 2
    assert half_dim > 1, "dim must be >= 4 (scale formula divides by half_dim - 1)"
    scale = math.log(10000.0) / (half_dim - 1)

    time_f32 = time.astype(jnp.float32).reshape(-1)
    b = time_f32.shape[0]
    freqs = jnp.exp(jnp.arange(half_dim, dtype=jnp.float32) * -scale)   # [H]

    # Small problems: fixed pallas_call / grid-step overhead dominates and XLA will
    # fuse this expression straight into the consuming time-MLP.
    if (b * dim < _FALLBACK_ELEMS) and not force_pallas:
        emb = time_f32[:, None] * freqs[None, :]
        return jnp.concatenate([jnp.sin(emb), jnp.cos(emb)], axis=-1)

    time2d = time_f32.reshape(b, 1)          # [B, 1]
    freqs2d = freqs.reshape(1, half_dim)     # [1, H]

    tile_b = _pick_tile_b(b, dim)
    grid = (pl.cdiv(b, tile_b),)             # ragged last block is fine
    aligned = (half_dim % 128 == 0)

    kernel = functools.partial(_sinusoidal_kernel, half_dim=half_dim, aligned=aligned)

    return pl.pallas_call(
        kernel,
        out_shape=jax.ShapeDtypeStruct((b, dim), jnp.float32),
        grid=grid,
        in_specs=[
            # time: tiled over batch; last dim (1) equals the full array dim.
            pl.BlockSpec((tile_b, 1), lambda i: (i, 0)),
            # freqs: constant index_map -> VMEM-resident, DMA'd once for the whole grid.
            pl.BlockSpec((1, half_dim), lambda i: (0, 0)),
        ],
        # last dim (dim) equals the full array dim -> layout-legal block.
        out_specs=pl.BlockSpec((tile_b, dim), lambda i: (i, 0)),
        compiler_params=pltpu.CompilerParams(
            dimension_semantics=("parallel",),     # shard batch tiles across TCs (v7x)
            vmem_limit_bytes=32 * 1024 * 1024,     # headroom above v5e's 16 MiB default
        ),
        cost_estimate=pl.CostEstimate(
            flops=16 * b * dim,                    # sin/cos VPU polynomials + outer product
            transcendentals=0,                     # freq exp happens once in the wrapper
            bytes_accessed=4 * (b + half_dim + b * dim),
        ),
    )(time2d, freqs2d)


if __name__ == "__main__":
    key = jax.random.PRNGKey(0)

    def ref_fn(t, dim):
        half = dim // 2
        sc = math.log(10000.0) / (half - 1)
        fr = jnp.exp(jnp.arange(half, dtype=jnp.float32) * -sc)
        emb = t.astype(jnp.float32)[:, None] * fr[None, :]
        return jnp.concatenate([jnp.sin(emb), jnp.cos(emb)], axis=-1)

    k1, k2 = jax.random.split(key)

    # 1) Module-typical small shape (batch=8, dim=32): force the Pallas (concat) path.
    t_small = jax.random.uniform(k1, (8,), jnp.float32, minval=0.0, maxval=1000.0)
    out_small = jax.block_until_ready(
        sinusoidal_position_embeddings(t_small, 32, force_pallas=True))
    assert out_small.shape == (8, 32), out_small.shape
    assert jnp.allclose(out_small, ref_fn(t_small, 32), atol=1e-5, rtol=1e-5)

    # 2) Lane-aligned fast path (half_dim % 128 == 0) with a multi-step parallel grid.
    t_big = jax.random.uniform(k2, (128,), jnp.float32, minval=0.0, maxval=1000.0)
    out_big = jax.block_until_ready(
        sinusoidal_position_embeddings(t_big, 256, force_pallas=True))
    assert out_big.shape == (128, 256), out_big.shape
    assert jnp.allclose(out_big, ref_fn(t_big, 256), atol=1e-5, rtol=1e-5)

    # 3) Auto small-problem fallback (plain jnp) matches the reference too.
    out_fb = jax.block_until_ready(sinusoidal_position_embeddings(t_small, 32))
    assert jnp.allclose(out_fb, ref_fn(t_small, 32), atol=1e-5, rtol=1e-5)

    print("KERNEL_OK")
</pallas_src>

<mosaic_0001>
module attributes {stable_mosaic.version = 11 : i64} {
  func.func @_sinusoidal_kernel(%arg0: i32, %arg1: memref<8x1xf32, #tpu.memory_space<vmem>>, %arg2: memref<1x16xf32, #tpu.memory_space<vmem>>, %arg3: memref<8x32xf32, #tpu.memory_space<vmem>>) attributes {dimension_semantics = [#tpu.dimension_semantics<parallel>], iteration_bounds = array<i64: 1>, scalar_prefetch = 0 : i64, scratch_operands = 0 : i64, tpu.core_type = #tpu.core_type<tc>, window_params = [{transform_indices = @transform_0, window_bounds = array<i64: 8, 1>}, {pipeline_mode = #tpu.pipeline_mode<synchronous>, transform_indices = @transform_1, window_bounds = array<i64: 1, 16>}, {transform_indices = @transform_2, window_bounds = array<i64: 8, 32>}]} {
    %c0 = arith.constant 0 : index
    %c0_0 = arith.constant 0 : index
    %0 = vector.load %arg1[%c0, %c0_0] : memref<8x1xf32, #tpu.memory_space<vmem>>, vector<8x1xf32>
    %c0_1 = arith.constant 0 : index
    %c0_2 = arith.constant 0 : index
    %1 = vector.load %arg2[%c0_1, %c0_2] : memref<1x16xf32, #tpu.memory_space<vmem>>, vector<1x16xf32>
    %2 = vector.broadcast %0 : vector<8x1xf32> to vector<8x16xf32>
    %3 = vector.broadcast %1 : vector<1x16xf32> to vector<8x16xf32>
    %4 = arith.mulf %2, %3 : vector<8x16xf32>
    %5 = math.sin %4 : vector<8x16xf32>
    %6 = math.cos %4 : vector<8x16xf32>
    %7 = tpu.concatenate %5, %6 in 1 : vector<8x16xf32>, vector<8x16xf32> -> vector<8x32xf32>
    %c0_3 = arith.constant 0 : index
    %c0_4 = arith.constant 0 : index
    %8 = vector.load %arg3[%c0_3, %c0_4] : memref<8x32xf32, #tpu.memory_space<vmem>>, vector<8x32xf32>
    tpu.vector_store %arg3[%c0_3, %c0_4], %7 {strides = array<i32>} : memref<8x32xf32, #tpu.memory_space<vmem>>, vector<8x32xf32>,
    return
  }
  func.func @transform_0(%arg0: i32) -> (i32, i32) {
    %c0_i32 = arith.constant 0 : i32
    %c0_i32_0 = arith.constant 0 : i32
    return %arg0, %c0_i32 : i32, i32
  }
  func.func @transform_1(%arg0: i32) -> (i32, i32) {
    %c0_i32 = arith.constant 0 : i32
    %c0_i32_0 = arith.constant 0 : i32
    %c0_i32_1 = arith.constant 0 : i32
    return %c0_i32, %c0_i32_0 : i32, i32
  }
  func.func @transform_2(%arg0: i32) -> (i32, i32) {
    %c0_i32 = arith.constant 0 : i32
    %c0_i32_0 = arith.constant 0 : i32
    return %arg0, %c0_i32 : i32, i32
  }
}

</mosaic_0001>

<llo_original>
// kernel: tpu_custom_call.1
$region0: #{tpu_custom_call.1}
  #allocation0 [shape = 'u32[]', space=smem, size = 0x4, offset = 0x4, fixed_abs, tag = 'smem constant byte address 0x4 - core index']
  #allocation1 [shape = 'u32[72,128]{1,0:T(1,128)}', space=vmem, size = 0x9000, scoped, tag = 'internal scratch']
  %s0 = inlined_call_operand.vmem [shape: f32[8,1], index: 0, kind: input, shape index: {}]
  %s1 = inlined_call_operand.vmem [shape: f32[1,16], index: 1, kind: input, shape index: {}]
  %s2 = inlined_call_operand.hbm [shape: f32[8,32], index: 2, kind: output, shape index: {}]
  %s3 = sld [smem:[#allocation0]]
  $region18: #{tpu_custom_call.1} parent=0
    _
  %s5 = ssub.s32 1, %s3
  %s6 = scalar_select 0, %s5, %s3
  $region1: #{tpu_custom_call.1} parent=0
    #allocation2 [shape = 'u8[4096]{0}', space=vmem, size = 0x1000, scoped, tag = 'output window, operand 0, single buffered']
    #allocation3 [shape = 's32[1]{0}', space=sflag, size = 0x4, scoped, tag = 'scoped memory for tpu_custom_call.1']
    %7 = vsyncpa [#allocation3], 0
    // Predicated region
    $region2: #{tpu_custom_call.1} parent=1 // pred_check
      _
    $region3: #{tpu_custom_call.1} parent=1 // pred_check_branch
      %9 = sbr.rel (0) target = $region5
    $region4: #{tpu_custom_call.1} parent=1 // pred_region
      _
    $region5: #{tpu_custom_call.1} parent=1 // pred_fallthru
      _
    // Predicated region
    $region6: #{tpu_custom_call.1} parent=1 // pred_check
      _
    $region7: #{tpu_custom_call.1} parent=1 // pred_check_branch
      %11 = sbr.rel (0) target = $region9
    $region8: #{tpu_custom_call.1} parent=1 // pred_region
      _
    $region9: #{tpu_custom_call.1} parent=1 // pred_fallthru
      _
    %v12 = vld [vmem:[%s0] sm:$0xff]
    %v13 = vld [vmem:[%s1] sm:$0x1]
    %15 = vset.pattern.permute.xlu0 0
    %16 = vperm.xlu0 %15, %v12
    %v17 = vpop.permute.xlu0 %16
    %v20 = vperm.slane %v13, 0
    %v22 = vmul.f32 %v17, %v20
    %v23 = vand.u32 2147483647, %v22
    %vm24 = vcmp.le.f32.partialorder %v23, 0.7853982
    %vm25 = vcmp.lt.s32.totalorder %v22, 0
    %v26 = vand.u32 %v22, 2139095040
    %v27 = vshrl.u32 %v26, 23
    %v28 = vsub.s32 %v27, 127
    %v29 = vand.u32 2147483647, %v22
    %v30 = vand.u32 %v29, 8388607
    %v31 = vor.u32 %v30, 8388608
    %v32 = vsub.s32 0, %v31
    %v33 = vadd.s32 %v28, 1
    %vm34 = vcmp.gt.s32.totalorder %v33, 0
    %v35 = vsel %vm34, %v33, 0
    %v36 = vshrl.u32 %v35, 5
    %v37 = vand.u32 %v35, 31
    %v38 = vsub.s32 32, %v37
    %v39 = vshrl.u32 683565275, %v38
    %v40 = vshll.u32 683565275, %v37
    %v41 = vshrl.u32 2475754826, %v38
    %v42 = vor.u32 %v40, %v41
    %v43 = vshll.u32 2475754826, %v37
    %v44 = vshrl.u32 2131351028, %v38
    %v45 = vor.u32 %v43, %v44
    %v46 = vshll.u32 2131351028, %v37
    %v47 = vshrl.u32 2102212464, %v38
    %v48 = vor.u32 %v46, %v47
    %v49 = vshll.u32 2102212464, %v37
    %v50 = vshrl.u32 920167782, %v38
    %v51 = vor.u32 %v49, %v50
    %v52 = vshll.u32 920167782, %v37
    %v53 = vshrl.u32 1326507024, %v38
    %v54 = vor.u32 %v52, %v53
    %vm55 = vcmp.lt.s32.totalorder %v36, 1
    %vm56 = vcmp.lt.s32.totalorder %v36, 2
    %vm57 = vcmp.lt.s32.totalorder %v36, 3
    %vm58 = vcmp.lt.s32.totalorder %v36, 4
    %v59 = vsel %vm55, %v39, %v42
    %v60 = vsel %vm58, %v48, 2102212464
    %v61 = vsel %vm57, %v45, %v60
    %v62 = vsel %vm56, %v59, %v61
    %v63 = vsel %vm55, %v42, %v45
    %v64 = vsel %vm58, %v51, 920167782
    %v65 = vsel %vm57, %v48, %v64
    %v66 = vsel %vm56, %v63, %v65
    %v67 = vsel %vm55, %v45, %v48
    %v68 = vsel %vm58, %v54, 1326507024
    %v69 = vsel %vm57, %v51, %v68
    %v70 = vsel %vm56, %v67, %v69
    %v71 = vshll.u32 %v31, 8
    %v72 = vand.u32 %v71, 65535
    %v73 = vshrl.u32 %v71, 16
    %v74 = vand.u32 %v70, 65535
    %v75 = vshrl.u32 %v70, 16
    %v76 = vmul.u32 %v72, %v74
    %v77 = vmul.u32 %v72, %v75
    %v78 = vmul.u32 %v73, %v74
    %v79 = vmul.u32 %v73, %v75
    %v80 = vshll.u32 %v77, 16
    %v81 = vshrl.u32 %v77, 16
    %v82 = vshll.u32 %v78, 16
    %v83 = vshrl.u32 %v78, 16
    %vm84 = vc.u32 %v76, %v80
    %v85 = vsel %vm84, 1, 0
    %v86 = vadd.s32 %v76, %v80
    %v87 = vadd.s32 %v79, %v85
    %vm88 = vc.u32 %v86, %v82
    %v89 = vsel %vm88, 1, 0
    %v90 = vadd.s32 %v86, %v82
    %v91 = vadd.s32 %v87, %v89
    %v92 = vadd.s32 %v91, %v81
    %v93 = vadd.s32 %v92, %v83
    %v94 = vand.u32 %v71, 65535
    %v95 = vshrl.u32 %v71, 16
    %v96 = vand.u32 %v66, 65535
    %v97 = vshrl.u32 %v66, 16
    %v98 = vmul.u32 %v94, %v96
    %v99 = vmul.u32 %v94, %v97
    %v100 = vmul.u32 %v95, %v96
    %v101 = vmul.u32 %v95, %v97
    %v102 = vshll.u32 %v99, 16
    %v103 = vshrl.u32 %v99, 16
    %v104 = vshll.u32 %v100, 16
    %v105 = vshrl.u32 %v100, 16
    %vm106 = vc.u32 %v98, %v102
    %v107 = vsel %vm106, 1, 0
    %v108 = vadd.s32 %v98, %v102
    %v109 = vadd.s32 %v101, %v107
    %vm110 = vc.u32 %v108, %v104
    %v111 = vsel %vm110, 1, 0
    %v112 = vadd.s32 %v108, %v104
    %v113 = vadd.s32 %v109, %v111
    %v114 = vadd.s32 %v113, %v103
    %v115 = vadd.s32 %v114, %v105
    %v116 = vmul.u32 %v71, %v62
    %v117 = vadd.s32 %v93, %v112
    %vm118 = vc.u32 %v93, %v112
    %v119 = vadd.s32 %v115, 1
    %v120 = vsel %vm118, %v119, %v115
    %v121 = vadd.s32 %v116, %v120
    %v122 = vadd.s32 %v121, 536870912
    %v123 = vshrl.u32 %v122, 30
    %v124 = vshll.u32 %v123, 30
    %v125 = vsub.s32 %v121, %v124
    %vm126 = vcmp.lt.s32.totalorder %v125, 0
    %v127 = vsub.s32 0, %v125
    %v128 = vsel %vm126, %v127, %v125
    %v129 = vclz %v128
    %v130 = vsub.s32 %v129, 2
    %vm131 = vcmp.gt.s32.totalorder 0, %v130
    %v132 = vsel %vm131, 0, %v130
    %v133 = vsub.s32 32, %v132
    %v134 = vshll.u32 %v125, %v132
    %v135 = vshrl.u32 %v117, %v133
    %v136 = vor.u32 %v134, %v135
    %v137 = vsub.s32 4294967266, %v132
    %v138 = vadd.s32 %v137, 127
    %v139 = vshll.u32 %v138, 23
    %v140 = vor.u32 4788187, %v139
    %v141 = vand.u32 2147483647, %v140
    %v143 = vcvt.s32.f32 %v136
    %v144 = vmul.f32 %v143, %v141
    %v145 = vxor.u32 %v144, 2147483648
    %v146 = vsel %vm25, %v145, %v144
    %v147 = vsub.s32 4, %v123
    %v148 = vsel %vm25, %v147, %v123
    %v149 = vsel %vm24, %v22, %v146
    %v150 = vsel %vm24, 0, %v148
    %v151 = vmul.f32 %v149, %v149
    %v152 = vmul.f32 %v151, -0.001358992
    %v153 = vadd.f32 %v152, 0.041655596
    %v154 = vmul.f32 %v151, %v153
    %v155 = vadd.f32 %v154, -0.4999988
    %v156 = vmul.f32 %v151, %v155
    %v157 = vadd.f32 1.0, %v156
    %v158 = vmul.f32 %v149, %v149
    %v159 = vmul.f32 %v158, -0.00019511016
    %v160 = vadd.f32 %v159, 0.008332121
    %v161 = vmul.f32 %v158, %v160
    %v162 = vadd.f32 %v161, -0.16666654
    %v163 = vmul.f32 %v158, %v162
    %v164 = vadd.f32 %v163, 1.0
    %v165 = vmul.f32 %v164, %v149
    %vm166 = vweird.f32 %v22
    %v167 = vadd.s32 %v150, 3
    %v168 = vand.u32 %v167, 3
    %vm169 = vcmp.lt.s32.totalorder %v168, 2
    %vm170 = vcmp.eq.s32.totalorder %v168, 0
    %v171 = vxor.u32 %v165, 2147483648
    %v172 = vsel %vm170, %v157, %v171
    %vm173 = vcmp.eq.s32.totalorder %v168, 2
    %v174 = vxor.u32 %v157, 2147483648
    %v175 = vsel %vm173, %v174, %v165
    %v176 = vsel %vm169, %v172, %v175
    %v177 = vsel %vm166, nan, %v176
    %v178 = vand.u32 2147483647, %v22
    %vm179 = vcmp.le.f32.partialorder %v178, 0.7853982
    %vm180 = vcmp.lt.s32.totalorder %v22, 0
    %v181 = vand.u32 %v22, 2139095040
    %v182 = vshrl.u32 %v181, 23
    %v183 = vsub.s32 %v182, 127
    %v184 = vand.u32 2147483647, %v22
    %v185 = vand.u32 %v184, 8388607
    %v186 = vor.u32 %v185, 8388608
    %v187 = vsub.s32 0, %v186
    %v188 = vadd.s32 %v183, 1
    %vm189 = vcmp.gt.s32.totalorder %v188, 0
    %v190 = vsel %vm189, %v188, 0
    %v191 = vshrl.u32 %v190, 5
    %v192 = vand.u32 %v190, 31
    %v193 = vsub.s32 32, %v192
    %v194 = vshrl.u32 683565275, %v193
    %v195 = vshll.u32 683565275, %v192
    %v196 = vshrl.u32 2475754826, %v193
    %v197 = vor.u32 %v195, %v196
    %v198 = vshll.u32 2475754826, %v192
    %v199 = vshrl.u32 2131351028, %v193
    %v200 = vor.u32 %v198, %v199
    %v201 = vshll.u32 2131351028, %v192
    %v202 = vshrl.u32 2102212464, %v193
    %v203 = vor.u32 %v201, %v202
    %v204 = vshll.u32 2102212464, %v192
    %v205 = vshrl.u32 920167782, %v193
    %v206 = vor.u32 %v204, %v205
    %v207 = vshll.u32 920167782, %v192
    %v208 = vshrl.u32 1326507024, %v193
    %v209 = vor.u32 %v207, %v208
    %vm210 = vcmp.lt.s32.totalorder %v191, 1
    %vm211 = vcmp.lt.s32.totalorder %v191, 2
    %vm212 = vcmp.lt.s32.totalorder %v191, 3
    %vm213 = vcmp.lt.s32.totalorder %v191, 4
    %v214 = vsel %vm210, %v194, %v197
    %v215 = vsel %vm213, %v203, 2102212464
    %v216 = vsel %vm212, %v200, %v215
    %v217 = vsel %vm211, %v214, %v216
    %v218 = vsel %vm210, %v197, %v200
    %v219 = vsel %vm213, %v206, 920167782
    %v220 = vsel %vm212, %v203, %v219
    %v221 = vsel %vm211, %v218, %v220
    %v222 = vsel %vm210, %v200, %v203
    %v223 = vsel %vm213, %v209, 1326507024
    %v224 = vsel %vm212, %v206, %v223
    %v225 = vsel %vm211, %v222, %v224
    %v226 = vshll.u32 %v186, 8
    %v227 = vand.u32 %v226, 65535
    %v228 = vshrl.u32 %v226, 16
    %v229 = vand.u32 %v225, 65535
    %v230 = vshrl.u32 %v225, 16
    %v231 = vmul.u32 %v227, %v229
    %v232 = vmul.u32 %v227, %v230
    %v233 = vmul.u32 %v228, %v229
    %v234 = vmul.u32 %v228, %v230
    %v235 = vshll.u32 %v232, 16
    %v236 = vshrl.u32 %v232, 16
    %v237 = vshll.u32 %v233, 16
    %v238 = vshrl.u32 %v233, 16
    %vm239 = vc.u32 %v231, %v235
    %v240 = vsel %vm239, 1, 0
    %v241 = vadd.s32 %v231, %v235
    %v242 = vadd.s32 %v234, %v240
    %vm243 = vc.u32 %v241, %v237
    %v244 = vsel %vm243, 1, 0
    %v245 = vadd.s32 %v241, %v237
    %v246 = vadd.s32 %v242, %v244
    %v247 = vadd.s32 %v246, %v236
    %v248 = vadd.s32 %v247, %v238
    %v249 = vand.u32 %v226, 65535
    %v250 = vshrl.u32 %v226, 16
    %v251 = vand.u32 %v221, 65535
    %v252 = vshrl.u32 %v221, 16
    %v253 = vmul.u32 %v249, %v251
    %v254 = vmul.u32 %v249, %v252
    %v255 = vmul.u32 %v250, %v251
    %v256 = vmul.u32 %v250, %v252
    %v257 = vshll.u32 %v254, 16
    %v258 = vshrl.u32 %v254, 16
    %v259 = vshll.u32 %v255, 16
    %v260 = vshrl.u32 %v255, 16
    %vm261 = vc.u32 %v253, %v257
    %v262 = vsel %vm261, 1, 0
    %v263 = vadd.s32 %v253, %v257
    %v264 = vadd.s32 %v256, %v262
    %vm265 = vc.u32 %v263, %v259
    %v266 = vsel %vm265, 1, 0
    %v267 = vadd.s32 %v263, %v259
    %v268 = vadd.s32 %v264, %v266
    %v269 = vadd.s32 %v268, %v258
    %v270 = vadd.s32 %v269, %v260
    %v271 = vmul.u32 %v226, %v217
    %v272 = vadd.s32 %v248, %v267
    %vm273 = vc.u32 %v248, %v267
    %v274 = vadd.s32 %v270, 1
    %v275 = vsel %vm273, %v274, %v270
    %v276 = vadd.s32 %v271, %v275
    %v277 = vadd.s32 %v276, 536870912
    %v278 = vshrl.u32 %v277, 30
    %v279 = vshll.u32 %v278, 30
    %v280 = vsub.s32 %v276, %v279
    %vm281 = vcmp.lt.s32.totalorder %v280, 0
    %v282 = vsub.s32 0, %v280
    %v283 = vsel %vm281, %v282, %v280
    %v284 = vclz %v283
    %v285 = vsub.s32 %v284, 2
    %vm286 = vcmp.gt.s32.totalorder 0, %v285
    %v287 = vsel %vm286, 0, %v285
    %v288 = vsub.s32 32, %v287
    %v289 = vshll.u32 %v280, %v287
    %v290 = vshrl.u32 %v272, %v288
    %v291 = vor.u32 %v289, %v290
    %v292 = vsub.s32 4294967266, %v287
    %v293 = vadd.s32 %v292, 127
    %v294 = vshll.u32 %v293, 23
    %v295 = vor.u32 4788187, %v294
    %v296 = vand.u32 2147483647, %v295
    %v298 = vcvt.s32.f32 %v291
    %v299 = vmul.f32 %v298, %v296
    %v300 = vxor.u32 %v299, 2147483648
    %v301 = vsel %vm180, %v300, %v299
    %v302 = vsub.s32 4, %v278
    %v303 = vsel %vm180, %v302, %v278
    %v304 = vsel %vm179, %v22, %v301
    %v305 = vsel %vm179, 0, %v303
    %v306 = vmul.f32 %v304, %v304
    %v307 = vmul.f32 %v306, -0.001358992
    %v308 = vadd.f32 %v307, 0.041655596
    %v309 = vmul.f32 %v306, %v308
    %v310 = vadd.f32 %v309, -0.4999988
    %v311 = vmul.f32 %v306, %v310
    %v312 = vadd.f32 1.0, %v311
    %v313 = vmul.f32 %v304, %v304
    %v314 = vmul.f32 %v313, -0.00019511016
    %v315 = vadd.f32 %v314, 0.008332121
    %v316 = vmul.f32 %v313, %v315
    %v317 = vadd.f32 %v316, -0.16666654
    %v318 = vmul.f32 %v313, %v317
    %v319 = vadd.f32 %v318, 1.0
    %v320 = vmul.f32 %v319, %v304
    %vm321 = vweird.f32 %v22
    %v322 = vand.u32 %v305, 3
    %vm323 = vcmp.lt.s32.totalorder %v322, 2
    %vm324 = vcmp.eq.s32.totalorder %v322, 0
    %v325 = vxor.u32 %v320, 2147483648
    %v326 = vsel %vm324, %v312, %v325
    %vm327 = vcmp.eq.s32.totalorder %v322, 2
    %v328 = vxor.u32 %v312, 2147483648
    %v329 = vsel %vm327, %v328, %v320
    %v330 = vsel %vm323, %v326, %v329
    %v331 = vsel %vm321, nan, %v330
    %333 = vrot.lane.b32.xlu0 %v331, 16
    %v334 = vpop.permute.xlu0 %333
    %vm336 = vcmask 130048
    %v337 = vsel %vm336, %v177, %v334
    %vm338 = vcmask 261120
    %339 = vst.msk [vmem:[#allocation2] sm:$0xff] %vm338, %v337
    // Predicated region
    $region10: #{tpu_custom_call.1} parent=1 // pred_check
      _
    $region11: #{tpu_custom_call.1} parent=1 // pred_check_branch
      %341 = sbr.rel (0) target = $region13
    $region12: #{tpu_custom_call.1} parent=1 // pred_region
      %343 = vsyncadd [#allocation3], 0
      %s345 = sshll.u32 [#allocation2], 4
      %s346 = int_to_ptr.vmem [resolvable:$true] %s345
      %s347 = sshll.u32 %s2, 4
      %s348 = int_to_ptr.hbm [resolvable:$true] %s347
      %350 = dma.vmem_to_hbm [thread:$0]  %s346, 128, %s348, [#allocation3]
    $region13: #{tpu_custom_call.1} parent=1 // pred_fallthru
      _
    // Predicated region
    $region14: #{tpu_custom_call.1} parent=1 // pred_check
      _
    $region15: #{tpu_custom_call.1} parent=1 // pred_check_branch
      %352 = sbr.rel (0) target = $region17
    $region16: #{tpu_custom_call.1} parent=1 // pred_region
      %354 = dma.done [#allocation3], 128
    $region17: #{tpu_custom_call.1} parent=1 // pred_fallthru
      _
    %355 = vsyncpa [#allocation3], 1

</llo_original>
